<compile_context>
chip_gen: v6e
topology: v6e:2x2x1
jax: 0.10.0
libtpu: 0.0.40
codegen_flags: <defaults>
</compile_context>

<pallas_src>
import jax
import jax.numpy as jnp
from jax import lax
from jax.experimental import pallas as pl
from jax.experimental.pallas import tpu as pltpu

_INV_SQRT2 = 0.7071067811865476


def _residual_block_kernel(x_ref, w1_ref, b1_ref, w2_ref, b2_ref,
                           out_ref, xpad, ypad):
    # Block shapes (all static):
    #   x_ref : (1, H, W*C)    input image, channels packed into lanes
    #   w1_ref: (3, W*C, W*C)  conv1 banded weights (BN1 scale folded in)
    #   b1_ref: (1, W*C)       BN1 bias, tiled over W
    #   w2_ref: (3, W*C, W*C)  conv2 banded weights (BN2 scale folded in)
    #   b2_ref: (1, W*C)       BN2 bias, tiled over W
    #   out_ref: (1, H, W*C)
    #   xpad/ypad: (H+2, W*C)  row-halo scratches (W padding lives in weights)
    H = out_ref.shape[1]
    WC = out_ref.shape[2]

    # Zero only the 1-row halo strips (interior is fully rewritten below);
    # unconditional so it stays correct if the grid is sharded across cores.
    zero_row = jnp.zeros((1, WC), jnp.float32)
    xpad[0:1, :] = zero_row
    xpad[H + 1:H + 2, :] = zero_row
    ypad[0:1, :] = zero_row
    ypad[H + 1:H + 2, :] = zero_row

    x = x_ref[0]                               # (H, W*C), lane-dense
    xpad[1:H + 1, :] = x

    # ---- conv1 + BN1: three banded MXU matmuls (one per ky tap) + bias ----
    acc1 = jnp.dot(xpad[0:H, :], w1_ref[0], preferred_element_type=jnp.float32)
    acc1 = acc1 + jnp.dot(xpad[1:H + 1, :], w1_ref[1],
                          preferred_element_type=jnp.float32)
    acc1 = acc1 + jnp.dot(xpad[2:H + 2, :], w1_ref[2],
                          preferred_element_type=jnp.float32)
    y1 = acc1 + b1_ref[...]                    # BN1 bias (scale is in weights)

    ypad[1:H + 1, :] = y1

    # ---- conv2 + BN2 ----
    acc2 = jnp.dot(ypad[0:H, :], w2_ref[0], preferred_element_type=jnp.float32)
    acc2 = acc2 + jnp.dot(ypad[1:H + 1, :], w2_ref[1],
                          preferred_element_type=jnp.float32)
    acc2 = acc2 + jnp.dot(ypad[2:H + 2, :], w2_ref[2],
                          preferred_element_type=jnp.float32)

    # ---- BN2 bias + identity residual + exact (erf) GELU, all lane-dense ----
    out = acc2 + b2_ref[...] + x
    out = 0.5 * out * (1.0 + lax.erf(out * _INV_SQRT2))
    out_ref[0] = out.astype(out_ref.dtype)


def _banded_conv_weights(w, scale, width):
    """Fold per-channel BN `scale` into HWIO 3x3 conv weights and expand each
    ky tap into a (W*Cin, W*Cout) banded matrix that also encodes the kx taps
    and the W-direction zero padding:
        band[ws*Cin+ci, wd*Cout+co] = w[ky, kx, ci, co]*scale[co]
            where ws = wd + kx - 1 (terms outside [0, W) are dropped = zero pad).
    """
    kh, kw, cin, cout = w.shape
    wf = (w * scale.reshape(1, 1, 1, cout)).astype(jnp.float32)
    taps = []
    for ky in range(kh):
        band = jnp.zeros((width * cin, width * cout), jnp.float32)
        for kx in range(kw):
            sel = jnp.eye(width, k=1 - kx, dtype=jnp.float32)  # ws -> wd map
            band = band + jnp.kron(sel, wf[ky, kx])
        taps.append(band)
    return jnp.stack(taps)                     # (kh, W*Cin, W*Cout)


def residual_block_pallas(x_nchw, w1, scale1, bias1, w2, scale2, bias2):
    """x_nchw: (N, C, H, W) float32; BN folded to per-channel scale/bias.
    Returns (N, C, H, W) float32."""
    N, Cin, H, W = x_nchw.shape
    kh, kw, _, Cout = w1.shape
    assert Cin == Cout, "identity residual requires in_channels == out_channels"
    WC = W * Cout

    # NCHW -> NHWC -> (N, H, W*C): channels packed onto the 128-lane axis.
    x = jnp.transpose(x_nchw, (0, 2, 3, 1)).astype(jnp.float32).reshape(N, H, WC)

    w1b = _banded_conv_weights(w1, scale1, W)          # BN1 scale folded in
    w2b = _banded_conv_weights(w2, scale2, W)          # BN2 scale folded in
    b1t = jnp.tile(bias1.reshape(1, Cout).astype(jnp.float32), (1, W))
    b2t = jnp.tile(bias2.reshape(1, Cout).astype(jnp.float32), (1, W))

    out = pl.pallas_call(
        _residual_block_kernel,
        out_shape=jax.ShapeDtypeStruct((N, H, WC), jnp.float32),
        grid_spec=pltpu.PrefetchScalarGridSpec(
            num_scalar_prefetch=0,
            grid=(N,),
            in_specs=[
                pl.BlockSpec((1, H, WC), lambda n: (n, 0, 0)),
                pl.BlockSpec((kh, WC, WC), lambda n: (0, 0, 0)),
                pl.BlockSpec((1, WC), lambda n: (0, 0)),
                pl.BlockSpec((kh, WC, WC), lambda n: (0, 0, 0)),
                pl.BlockSpec((1, WC), lambda n: (0, 0)),
            ],
            out_specs=pl.BlockSpec((1, H, WC), lambda n: (n, 0, 0)),
            scratch_shapes=[pltpu.VMEM((H + 2, WC), jnp.float32),
                            pltpu.VMEM((H + 2, WC), jnp.float32)],
        ),
        compiler_params=pltpu.CompilerParams(
            dimension_semantics=("parallel",)),
    )(x, w1b, b1t, w2b, b2t)

    return jnp.transpose(out.reshape(N, H, W, Cout), (0, 3, 1, 2))


def _ref_forward(x_nchw, w1, s1, b1, w2, s2, b2):
    """Pure-JAX reference (same semantics) for correctness checking."""
    x = jnp.transpose(x_nchw, (0, 2, 3, 1))
    dn = ("NHWC", "HWIO", "NHWC")
    y = lax.conv_general_dilated(x, w1, (1, 1), "SAME", dimension_numbers=dn)
    y = y * s1 + b1
    y = lax.conv_general_dilated(y, w2, (1, 1), "SAME", dimension_numbers=dn)
    y = y * s2 + b2
    out = jax.nn.gelu(y + x, approximate=False)
    return jnp.transpose(out, (0, 3, 1, 2))


def _make_params(key, C):
    """Deterministic synthetic parameters; BN folded to scale/bias (eps=1e-5)."""
    ks = jax.random.split(key, 10)
    eps = 1e-5
    w1 = 0.1 * jax.random.normal(ks[0], (3, 3, C, C), jnp.float32)
    w2 = 0.1 * jax.random.normal(ks[1], (3, 3, C, C), jnp.float32)

    g1 = 1.0 + 0.1 * jax.random.normal(ks[2], (C,), jnp.float32)
    be1 = 0.1 * jax.random.normal(ks[3], (C,), jnp.float32)
    m1 = 0.1 * jax.random.normal(ks[4], (C,), jnp.float32)
    v1 = jax.random.uniform(ks[5], (C,), jnp.float32, 0.5, 1.5)
    s1 = g1 / jnp.sqrt(v1 + eps)
    b1 = be1 - m1 * s1

    g2 = 1.0 + 0.1 * jax.random.normal(ks[6], (C,), jnp.float32)
    be2 = 0.1 * jax.random.normal(ks[7], (C,), jnp.float32)
    m2 = 0.1 * jax.random.normal(ks[8], (C,), jnp.float32)
    v2 = jax.random.uniform(ks[9], (C,), jnp.float32, 0.5, 1.5)
    s2 = g2 / jnp.sqrt(v2 + eps)
    b2 = be2 - m2 * s2
    return w1, s1, b1, w2, s2, b2


if __name__ == "__main__":
    N, C, H, W = 2, 8, 16, 16                  # W * C == 128 -> lane-dense slabs
    key = jax.random.PRNGKey(0)
    kx, kp = jax.random.split(key)
    x = jax.random.normal(kx, (N, C, H, W), jnp.float32)
    w1, s1, b1, w2, s2, b2 = _make_params(kp, C)

    out = residual_block_pallas(x, w1, s1, b1, w2, s2, b2)
    out = jax.block_until_ready(out)

    ref = _ref_forward(x, w1, s1, b1, w2, s2, b2)
    assert out.shape == (N, C, H, W)
    assert jnp.allclose(out, ref, atol=2e-3, rtol=2e-3), "mismatch vs reference"

    print("KERNEL_OK")
</pallas_src>

<mosaic_0001>
module attributes {stable_mosaic.version = 11 : i64} {
  func.func @_residual_block_kernel(%arg0: i32, %arg1: memref<1x16x128xf32, #tpu.memory_space<vmem>>, %arg2: memref<3x128x128xf32, #tpu.memory_space<vmem>>, %arg3: memref<1x128xf32, #tpu.memory_space<vmem>>, %arg4: memref<3x128x128xf32, #tpu.memory_space<vmem>>, %arg5: memref<1x128xf32, #tpu.memory_space<vmem>>, %arg6: memref<1x16x128xf32, #tpu.memory_space<vmem>>, %arg7: memref<18x128xf32, #tpu.memory_space<vmem>>, %arg8: memref<18x128xf32, #tpu.memory_space<vmem>>) attributes {dimension_semantics = [#tpu.dimension_semantics<parallel>], iteration_bounds = array<i64: 2>, scalar_prefetch = 0 : i64, scratch_operands = 2 : i64, tpu.core_type = #tpu.core_type<tc>, window_params = [{transform_indices = @transform_0, window_bounds = array<i64: 1, 16, 128>}, {pipeline_mode = #tpu.pipeline_mode<synchronous>, transform_indices = @transform_1, window_bounds = array<i64: 3, 128, 128>}, {pipeline_mode = #tpu.pipeline_mode<synchronous>, transform_indices = @transform_2, window_bounds = array<i64: 1, 128>}, {pipeline_mode = #tpu.pipeline_mode<synchronous>, transform_indices = @transform_3, window_bounds = array<i64: 3, 128, 128>}, {pipeline_mode = #tpu.pipeline_mode<synchronous>, transform_indices = @transform_4, window_bounds = array<i64: 1, 128>}, {transform_indices = @transform_5, window_bounds = array<i64: 1, 16, 128>}]} {
    %cst = arith.constant 0.000000e+00 : f32
    %0 = vector.broadcast %cst : f32 to vector<1x128xf32>
    %c0 = arith.constant 0 : index
    %c0_0 = arith.constant 0 : index
    %1 = vector.load %arg7[%c0, %c0_0] : memref<18x128xf32, #tpu.memory_space<vmem>>, vector<1x128xf32>
    tpu.vector_store %arg7[%c0, %c0_0], %0 {strides = array<i32>} : memref<18x128xf32, #tpu.memory_space<vmem>>, vector<1x128xf32>,
    %c17 = arith.constant 17 : index
    %c0_1 = arith.constant 0 : index
    %2 = vector.load %arg7[%c17, %c0_1] : memref<18x128xf32, #tpu.memory_space<vmem>>, vector<1x128xf32>
    tpu.vector_store %arg7[%c17, %c0_1], %0 {strides = array<i32>} : memref<18x128xf32, #tpu.memory_space<vmem>>, vector<1x128xf32>,
    %c0_2 = arith.constant 0 : index
    %c0_3 = arith.constant 0 : index
    %3 = vector.load %arg8[%c0_2, %c0_3] : memref<18x128xf32, #tpu.memory_space<vmem>>, vector<1x128xf32>
    tpu.vector_store %arg8[%c0_2, %c0_3], %0 {strides = array<i32>} : memref<18x128xf32, #tpu.memory_space<vmem>>, vector<1x128xf32>,
    %c17_4 = arith.constant 17 : index
    %c0_5 = arith.constant 0 : index
    %4 = vector.load %arg8[%c17_4, %c0_5] : memref<18x128xf32, #tpu.memory_space<vmem>>, vector<1x128xf32>
    tpu.vector_store %arg8[%c17_4, %c0_5], %0 {strides = array<i32>} : memref<18x128xf32, #tpu.memory_space<vmem>>, vector<1x128xf32>,
    %c0_6 = arith.constant 0 : index
    %c0_7 = arith.constant 0 : index
    %c0_8 = arith.constant 0 : index
    %5 = vector.load %arg1[%c0_6, %c0_7, %c0_8] : memref<1x16x128xf32, #tpu.memory_space<vmem>>, vector<1x16x128xf32>
    %6 = vector.shape_cast %5 : vector<1x16x128xf32> to vector<16x128xf32>
    %c1 = arith.constant 1 : index
    %c0_9 = arith.constant 0 : index
    %7 = vector.load %arg7[%c1, %c0_9] : memref<18x128xf32, #tpu.memory_space<vmem>>, vector<16x128xf32>
    tpu.vector_store %arg7[%c1, %c0_9], %6 {strides = array<i32>} : memref<18x128xf32, #tpu.memory_space<vmem>>, vector<16x128xf32>,
    %c0_10 = arith.constant 0 : index
    %c0_11 = arith.constant 0 : index
    %8 = vector.load %arg7[%c0_10, %c0_11] : memref<18x128xf32, #tpu.memory_space<vmem>>, vector<16x128xf32>
    %c0_12 = arith.constant 0 : index
    %c0_13 = arith.constant 0 : index
    %c0_14 = arith.constant 0 : index
    %9 = vector.load %arg2[%c0_12, %c0_13, %c0_14] : memref<3x128x128xf32, #tpu.memory_space<vmem>>, vector<1x128x128xf32>
    %10 = vector.shape_cast %9 : vector<1x128x128xf32> to vector<128x128xf32>
    %cst_15 = arith.constant dense<0.000000e+00> : vector<16x128xf32>
    %11 = tpu.matmul %8, %10, %cst_15 {dimension_numbers = #tpu.dot_dimension_numbers<[1], [0], [0], [1], [0, 0, 1, 1], [], []>} : vector<16x128xf32>, vector<128x128xf32>, vector<16x128xf32> -> vector<16x128xf32>
    %c1_16 = arith.constant 1 : index
    %c0_17 = arith.constant 0 : index
    %12 = vector.load %arg7[%c1_16, %c0_17] : memref<18x128xf32, #tpu.memory_space<vmem>>, vector<16x128xf32>
    %c1_18 = arith.constant 1 : index
    %c0_19 = arith.constant 0 : index
    %c0_20 = arith.constant 0 : index
    %13 = vector.load %arg2[%c1_18, %c0_19, %c0_20] : memref<3x128x128xf32, #tpu.memory_space<vmem>>, vector<1x128x128xf32>
    %14 = vector.shape_cast %13 : vector<1x128x128xf32> to vector<128x128xf32>
    %cst_21 = arith.constant dense<0.000000e+00> : vector<16x128xf32>
    %15 = tpu.matmul %12, %14, %cst_21 {dimension_numbers = #tpu.dot_dimension_numbers<[1], [0], [0], [1], [0, 0, 1, 1], [], []>} : vector<16x128xf32>, vector<128x128xf32>, vector<16x128xf32> -> vector<16x128xf32>
    %16 = arith.addf %11, %15 : vector<16x128xf32>
    %c2 = arith.constant 2 : index
    %c0_22 = arith.constant 0 : index
    %17 = vector.load %arg7[%c2, %c0_22] : memref<18x128xf32, #tpu.memory_space<vmem>>, vector<16x128xf32>
    %c2_23 = arith.constant 2 : index
    %c0_24 = arith.constant 0 : index
    %c0_25 = arith.constant 0 : index
    %18 = vector.load %arg2[%c2_23, %c0_24, %c0_25] : memref<3x128x128xf32, #tpu.memory_space<vmem>>, vector<1x128x128xf32>
    %19 = vector.shape_cast %18 : vector<1x128x128xf32> to vector<128x128xf32>
    %cst_26 = arith.constant dense<0.000000e+00> : vector<16x128xf32>
    %20 = tpu.matmul %17, %19, %cst_26 {dimension_numbers = #tpu.dot_dimension_numbers<[1], [0], [0], [1], [0, 0, 1, 1], [], []>} : vector<16x128xf32>, vector<128x128xf32>, vector<16x128xf32> -> vector<16x128xf32>
    %21 = arith.addf %16, %20 : vector<16x128xf32>
    %c0_27 = arith.constant 0 : index
    %c0_28 = arith.constant 0 : index
    %22 = vector.load %arg3[%c0_27, %c0_28] : memref<1x128xf32, #tpu.memory_space<vmem>>, vector<1x128xf32>
    %23 = vector.broadcast %22 : vector<1x128xf32> to vector<16x128xf32>
    %24 = arith.addf %21, %23 : vector<16x128xf32>
    %c1_29 = arith.constant 1 : index
    %c0_30 = arith.constant 0 : index
    %25 = vector.load %arg8[%c1_29, %c0_30] : memref<18x128xf32, #tpu.memory_space<vmem>>, vector<16x128xf32>
    tpu.vector_store %arg8[%c1_29, %c0_30], %24 {strides = array<i32>} : memref<18x128xf32, #tpu.memory_space<vmem>>, vector<16x128xf32>,
    %c0_31 = arith.constant 0 : index
    %c0_32 = arith.constant 0 : index
    %26 = vector.load %arg8[%c0_31, %c0_32] : memref<18x128xf32, #tpu.memory_space<vmem>>, vector<16x128xf32>
    %c0_33 = arith.constant 0 : index
    %c0_34 = arith.constant 0 : index
    %c0_35 = arith.constant 0 : index
    %27 = vector.load %arg4[%c0_33, %c0_34, %c0_35] : memref<3x128x128xf32, #tpu.memory_space<vmem>>, vector<1x128x128xf32>
    %28 = vector.shape_cast %27 : vector<1x128x128xf32> to vector<128x128xf32>
    %cst_36 = arith.constant dense<0.000000e+00> : vector<16x128xf32>
    %29 = tpu.matmul %26, %28, %cst_36 {dimension_numbers = #tpu.dot_dimension_numbers<[1], [0], [0], [1], [0, 0, 1, 1], [], []>} : vector<16x128xf32>, vector<128x128xf32>, vector<16x128xf32> -> vector<16x128xf32>
    %c1_37 = arith.constant 1 : index
    %c0_38 = arith.constant 0 : index
    %30 = vector.load %arg8[%c1_37, %c0_38] : memref<18x128xf32, #tpu.memory_space<vmem>>, vector<16x128xf32>
    %c1_39 = arith.constant 1 : index
    %c0_40 = arith.constant 0 : index
    %c0_41 = arith.constant 0 : index
    %31 = vector.load %arg4[%c1_39, %c0_40, %c0_41] : memref<3x128x128xf32, #tpu.memory_space<vmem>>, vector<1x128x128xf32>
    %32 = vector.shape_cast %31 : vector<1x128x128xf32> to vector<128x128xf32>
    %cst_42 = arith.constant dense<0.000000e+00> : vector<16x128xf32>
    %33 = tpu.matmul %30, %32, %cst_42 {dimension_numbers = #tpu.dot_dimension_numbers<[1], [0], [0], [1], [0, 0, 1, 1], [], []>} : vector<16x128xf32>, vector<128x128xf32>, vector<16x128xf32> -> vector<16x128xf32>
    %34 = arith.addf %29, %33 : vector<16x128xf32>
    %c2_43 = arith.constant 2 : index
    %c0_44 = arith.constant 0 : index
    %35 = vector.load %arg8[%c2_43, %c0_44] : memref<18x128xf32, #tpu.memory_space<vmem>>, vector<16x128xf32>
    %c2_45 = arith.constant 2 : index
    %c0_46 = arith.constant 0 : index
    %c0_47 = arith.constant 0 : index
    %36 = vector.load %arg4[%c2_45, %c0_46, %c0_47] : memref<3x128x128xf32, #tpu.memory_space<vmem>>, vector<1x128x128xf32>
    %37 = vector.shape_cast %36 : vector<1x128x128xf32> to vector<128x128xf32>
    %cst_48 = arith.constant dense<0.000000e+00> : vector<16x128xf32>
    %38 = tpu.matmul %35, %37, %cst_48 {dimension_numbers = #tpu.dot_dimension_numbers<[1], [0], [0], [1], [0, 0, 1, 1], [], []>} : vector<16x128xf32>, vector<128x128xf32>, vector<16x128xf32> -> vector<16x128xf32>
    %39 = arith.addf %34, %38 : vector<16x128xf32>
    %c0_49 = arith.constant 0 : index
    %c0_50 = arith.constant 0 : index
    %40 = vector.load %arg5[%c0_49, %c0_50] : memref<1x128xf32, #tpu.memory_space<vmem>>, vector<1x128xf32>
    %41 = vector.broadcast %40 : vector<1x128xf32> to vector<16x128xf32>
    %42 = arith.addf %39, %41 : vector<16x128xf32>
    %43 = arith.addf %42, %6 : vector<16x128xf32>
    %cst_51 = arith.constant 5.000000e-01 : f32
    %44 = vector.broadcast %cst_51 : f32 to vector<16x128xf32>
    %45 = arith.mulf %44, %43 : vector<16x128xf32>
    %cst_52 = arith.constant 0.707106769 : f32
    %46 = vector.broadcast %cst_52 : f32 to vector<16x128xf32>
    %47 = arith.mulf %43, %46 : vector<16x128xf32>
    %48 = math.erf %47 : vector<16x128xf32>
    %cst_53 = arith.constant 1.000000e+00 : f32
    %49 = vector.broadcast %cst_53 : f32 to vector<16x128xf32>
    %50 = arith.addf %49, %48 : vector<16x128xf32>
    %51 = arith.mulf %45, %50 : vector<16x128xf32>
    %c0_54 = arith.constant 0 : index
    %c0_55 = arith.constant 0 : index
    %c0_56 = arith.constant 0 : index
    %52 = vector.load %arg6[%c0_54, %c0_55, %c0_56] : memref<1x16x128xf32, #tpu.memory_space<vmem>>, vector<1x16x128xf32>
    %53 = vector.shape_cast %52 : vector<1x16x128xf32> to vector<16x128xf32>
    %54 = vector.shape_cast %51 : vector<16x128xf32> to vector<1x16x128xf32>
    tpu.vector_store %arg6[%c0_54, %c0_55, %c0_56], %54 {strides = array<i32>} : memref<1x16x128xf32, #tpu.memory_space<vmem>>, vector<1x16x128xf32>,
    return
  }
  func.func @transform_0(%arg0: i32) -> (i32, i32, i32) {
    %c0_i32 = arith.constant 0 : i32
    %c0_i32_0 = arith.constant 0 : i32
    %c0_i32_1 = arith.constant 0 : i32
    return %arg0, %c0_i32, %c0_i32_0 : i32, i32, i32
  }
  func.func @transform_1(%arg0: i32) -> (i32, i32, i32) {
    %c0_i32 = arith.constant 0 : i32
    %c0_i32_0 = arith.constant 0 : i32
    %c0_i32_1 = arith.constant 0 : i32
    %c0_i32_2 = arith.constant 0 : i32
    return %c0_i32, %c0_i32_0, %c0_i32_1 : i32, i32, i32
  }
  func.func @transform_2(%arg0: i32) -> (i32, i32) {
    %c0_i32 = arith.constant 0 : i32
    %c0_i32_0 = arith.constant 0 : i32
    %c0_i32_1 = arith.constant 0 : i32
    return %c0_i32, %c0_i32_0 : i32, i32
  }
  func.func @transform_3(%arg0: i32) -> (i32, i32, i32) {
    %c0_i32 = arith.constant 0 : i32
    %c0_i32_0 = arith.constant 0 : i32
    %c0_i32_1 = arith.constant 0 : i32
    %c0_i32_2 = arith.constant 0 : i32
    return %c0_i32, %c0_i32_0, %c0_i32_1 : i32, i32, i32
  }
  func.func @transform_4(%arg0: i32) -> (i32, i32) {
    %c0_i32 = arith.constant 0 : i32
    %c0_i32_0 = arith.constant 0 : i32
    %c0_i32_1 = arith.constant 0 : i32
    return %c0_i32, %c0_i32_0 : i32, i32
  }
  func.func @transform_5(%arg0: i32) -> (i32, i32, i32) {
    %c0_i32 = arith.constant 0 : i32
    %c0_i32_0 = arith.constant 0 : i32
    %c0_i32_1 = arith.constant 0 : i32
    return %arg0, %c0_i32, %c0_i32_0 : i32, i32, i32
  }
}

</mosaic_0001>

<llo_original>
// kernel: tpu_custom_call.1
$region0: #{tpu_custom_call.1}
  #allocation0 [shape = 'u32[]', space=smem, size = 0x4, offset = 0x4, fixed_abs, tag = 'smem constant byte address 0x4 - core index']
  #allocation1 [shape = 'u32[144,128]{1,0:T(1,128)}', space=vmem, size = 0x12000, scoped, tag = 'internal scratch']
  #allocation2 [shape = 'f32[18,128]{1,0:T(8,128)}', space=vmem, size = 0x3000, scoped, tag = 'scratch operand']
  #allocation3 [shape = 'f32[18,128]{1,0:T(8,128)}', space=vmem, size = 0x3000, scoped, tag = 'scratch operand']
  %s0 = inlined_call_operand.hbm [shape: f32[2,16,128], index: 0, kind: input, shape index: {}]
  %s1 = inlined_call_operand.hbm [shape: f32[3,128,128], index: 1, kind: input, shape index: {}]
  %s2 = inlined_call_operand.vmem [shape: f32[1,128], index: 2, kind: input, shape index: {}]
  %s3 = inlined_call_operand.hbm [shape: f32[3,128,128], index: 3, kind: input, shape index: {}]
  %s4 = inlined_call_operand.vmem [shape: f32[1,128], index: 4, kind: input, shape index: {}]
  %s5 = inlined_call_operand.hbm [shape: f32[2,16,128], index: 5, kind: output, shape index: {}]
  %s6 = sld [smem:[#allocation0]]
  $region65: #{tpu_custom_call.1} parent=0
    _
  %s8 = ssub.s32 1, %s6
  %s9 = scalar_select 0, %s8, %s6
  $region1: #{tpu_custom_call.1} parent=0
    #allocation4 [shape = 'u8[16384]{0}', space=vmem, size = 0x4000, scoped, tag = 'input window, operand 0']
    #allocation5 [shape = 's32[2]{0}', space=sflag, size = 0x8, scoped, tag = 'scoped memory for tpu_custom_call.1']
    #allocation6 [shape = 's32[2]{0}', space=sflag, size = 0x8, scoped, tag = 'scoped memory for tpu_custom_call.1']
    #allocation7 [shape = 'u8[196608]{0}', space=vmem, size = 0x30000, scoped, tag = 'input window, operand 1, single buffered']
    #allocation8 [shape = 's32[1]{0}', space=sflag, size = 0x4, scoped, tag = 'scoped memory for tpu_custom_call.1']
    #allocation9 [shape = 'u8[196608]{0}', space=vmem, size = 0x30000, scoped, tag = 'input window, operand 3, single buffered']
    #allocation10 [shape = 'u8[16384]{0}', space=vmem, size = 0x4000, scoped, tag = 'output window, operand 0']
    %10 = vsyncpa [#allocation5], 0
    %s11 = scalar_lea.sflag [#allocation5], 1
    %12 = vsyncpa %s11, 0
    %13 = vsyncpa [#allocation8], 0
    %14 = vsyncpa [#allocation6], 0
    %s15 = scalar_lea.sflag [#allocation6], 1
    %16 = vsyncpa %s15, 0
    loop: start=0, step=1, limit=4
    $region2: #{tpu_custom_call.1} parent=1 // loop_pre_header
      _
    $region3: #{tpu_custom_call.1} parent=1 // loop_header
      %s18 = sphi 0, %s22
      %p19 = scmp.ge.s32.totalorder %s18, 4
      %s28 = sphi 0, %s30
      %s31 = sphi 0, %s28
      %s32 = sphi 0, %s31
      %s48 = sphi 0, %s32
      %s52 = sphi 0, %s52
      %s54 = sphi 0, %s52
      %s55 = sphi 0, %s54
      %s69 = sphi 0, %s55
      %s73 = sphi 0, %s73
      %s75 = sphi 0, %s73
      %s76 = sphi 0, %s75
      %s90 = sphi 0, %s76
      %s94 = sphi 0, %s94
      %s96 = sphi 0, %s94
      %s97 = sphi 0, %s96
      %s111 = sphi 0, %s97
      %s115 = sphi 0, %s115
      %s117 = sphi 0, %s115
      %s118 = sphi 0, %s117
      %s132 = sphi 0, %s118
      %s138 = sphi 0, %s140
      %s141 = sphi 0, %s138
      %s142 = sphi 0, %s141
      %s158 = sphi 0, %s142
    $region4: #{tpu_custom_call.1} parent=1 // loop_header_branch
      %21 = sbr.rel (%p19) target = $region8
    $region5: #{tpu_custom_call.1} parent=1 // loop_body
      %s23 = ssub.s32 %s18, 1
      %s24 = ssub.s32 %s18, 2
      %s25 = sadd.s32 %s18, 1
      %s26 = ssub.s32 %s18, %s25
      %p27 = scmp.eq.s32.totalorder %s26, 0
      %s29 = sadd.s32 %s28, 1
      %s30 = scalar_select %p27, %s28, %s29
      %p33 = pneg %p27
      %p34 = scmp.eq.s32.totalorder %s18, 1
      %p35 = por %p33, %p34
      %p36 = scmp.ne.s32.totalorder %s28, %s31
      %p37 = scmp.eq.s32.totalorder %s18, 0
      %p38 = por %p36, %p37
      %p39 = scmp.ne.s32.totalorder %s28, %s31
      %p40 = scmp.eq.s32.totalorder %s23, 1
      %p41 = por %p39, %p40
      %p42 = scmp.ne.s32.totalorder %s31, %s32
      %p43 = scmp.eq.s32.totalorder %s23, 0
      %p44 = por %p42, %p43
      %p45 = scmp.ne.s32.totalorder %s31, %s32
      %p46 = scmp.eq.s32.totalorder %s24, 1
      %p47 = por %p45, %p46
      %p49 = scmp.ne.s32.totalorder %s32, %s48
      %p50 = scmp.eq.s32.totalorder %s24, 0
      %p51 = por %p49, %p50
      %s53 = sadd.s32 %s52, 1
      %p56 = scmp.eq.s32.totalorder %s18, 1
      %p57 = scmp.ne.s32.totalorder %s52, %s54
      %p58 = scmp.eq.s32.totalorder %s18, 0
      %p59 = por %p57, %p58
      %p60 = scmp.ne.s32.totalorder %s52, %s54
      %p61 = scmp.eq.s32.totalorder %s23, 1
      %p62 = por %p60, %p61
      %p63 = scmp.ne.s32.totalorder %s54, %s55
      %p64 = scmp.eq.s32.totalorder %s23, 0
      %p65 = por %p63, %p64
      %p66 = scmp.ne.s32.totalorder %s54, %s55
      %p67 = scmp.eq.s32.totalorder %s24, 1
      %p68 = por %p66, %p67
      %p70 = scmp.ne.s32.totalorder %s55, %s69
      %p71 = scmp.eq.s32.totalorder %s24, 0
      %p72 = por %p70, %p71
      %s74 = sadd.s32 %s73, 1
      %p77 = scmp.eq.s32.totalorder %s18, 1
      %p78 = scmp.ne.s32.totalorder %s73, %s75
      %p79 = scmp.eq.s32.totalorder %s18, 0
      %p80 = por %p78, %p79
      %p81 = scmp.ne.s32.totalorder %s73, %s75
      %p82 = scmp.eq.s32.totalorder %s23, 1
      %p83 = por %p81, %p82
      %p84 = scmp.ne.s32.totalorder %s75, %s76
      %p85 = scmp.eq.s32.totalorder %s23, 0
      %p86 = por %p84, %p85
      %p87 = scmp.ne.s32.totalorder %s75, %s76
      %p88 = scmp.eq.s32.totalorder %s24, 1
      %p89 = por %p87, %p88
      %p91 = scmp.ne.s32.totalorder %s76, %s90
      %p92 = scmp.eq.s32.totalorder %s24, 0
      %p93 = por %p91, %p92
      %s95 = sadd.s32 %s94, 1
      %p98 = scmp.eq.s32.totalorder %s18, 1
      %p99 = scmp.ne.s32.totalorder %s94, %s96
      %p100 = scmp.eq.s32.totalorder %s18, 0
      %p101 = por %p99, %p100
      %p102 = scmp.ne.s32.totalorder %s94, %s96
      %p103 = scmp.eq.s32.totalorder %s23, 1
      %p104 = por %p102, %p103
      %p105 = scmp.ne.s32.totalorder %s96, %s97
      %p106 = scmp.eq.s32.totalorder %s23, 0
      %p107 = por %p105, %p106
      %p108 = scmp.ne.s32.totalorder %s96, %s97
      %p109 = scmp.eq.s32.totalorder %s24, 1
      %p110 = por %p108, %p109
      %p112 = scmp.ne.s32.totalorder %s97, %s111
      %p113 = scmp.eq.s32.totalorder %s24, 0
      %p114 = por %p112, %p113
      %s116 = sadd.s32 %s115, 1
      %p119 = scmp.eq.s32.totalorder %s18, 1
      %p120 = scmp.ne.s32.totalorder %s115, %s117
      %p121 = scmp.eq.s32.totalorder %s18, 0
      %p122 = por %p120, %p121
      %p123 = scmp.ne.s32.totalorder %s115, %s117
      %p124 = scmp.eq.s32.totalorder %s23, 1
      %p125 = por %p123, %p124
      %p126 = scmp.ne.s32.totalorder %s117, %s118
      %p127 = scmp.eq.s32.totalorder %s23, 0
      %p128 = por %p126, %p127
      %p129 = scmp.ne.s32.totalorder %s117, %s118
      %p130 = scmp.eq.s32.totalorder %s24, 1
      %p131 = por %p129, %p130
      %p133 = scmp.ne.s32.totalorder %s118, %s132
      %p134 = scmp.eq.s32.totalorder %s24, 0
      %p135 = por %p133, %p134
      %s136 = ssub.s32 %s18, %s25
      %p137 = scmp.eq.s32.totalorder %s136, 0
      %s139 = sadd.s32 %s138, 1
      %s140 = scalar_select %p137, %s138, %s139
      %p143 = pneg %p137
      %p144 = scmp.eq.s32.totalorder %s18, 1
      %p145 = por %p143, %p144
      %p146 = scmp.ne.s32.totalorder %s138, %s141
      %p147 = scmp.eq.s32.totalorder %s18, 0
      %p148 = por %p146, %p147
      %p149 = scmp.ne.s32.totalorder %s138, %s141
      %p150 = scmp.eq.s32.totalorder %s23, 1
      %p151 = por %p149, %p150
      %p152 = scmp.ne.s32.totalorder %s141, %s142
      %p153 = scmp.eq.s32.totalorder %s23, 0
      %p154 = por %p152, %p153
      %p155 = scmp.ne.s32.totalorder %s141, %s142
      %p156 = scmp.eq.s32.totalorder %s24, 1
      %p157 = por %p155, %p156
      %p159 = scmp.ne.s32.totalorder %s142, %s158
      %p160 = scmp.eq.s32.totalorder %s24, 0
      %p161 = por %p159, %p160
      %p162 = scmp.le.s32.totalorder 1, %s18
      %p163 = scmp.lt.s32.totalorder %s18, 3
      %p164 = pnand %p162, %p163
      %p165 = pneg %p164
      // Predicated region
      $region9: #{tpu_custom_call.1} parent=5 // pred_check
        _
      $region10: #{tpu_custom_call.1} parent=5 // pred_check_branch
        %167 = sbr.rel (%p164) target = $region12
      $region11: #{tpu_custom_call.1} parent=5 // pred_region
        %s168 = ssub.s32 %s18, 1
        // Predicated region
        $region13: #{tpu_custom_call.1} parent=11 // pred_check
          %p169 = pneg %p65
        $region14: #{tpu_custom_call.1} parent=11 // pred_check_branch
          %171 = sbr.rel (%p169) target = $region16
        $region15: #{tpu_custom_call.1} parent=11 // pred_region
          %s173 = ssub.s32 6144, 6144
          %174 = vsyncadd [#allocation8], %s173
          %s175 = sshll.u32 [#allocation7], 4
          %s176 = int_to_ptr.vmem [resolvable:$true] %s175
          %181 = dma.hbm_to_vmem [thread:$0]  %s1, 6144, %s176, [#allocation8], 128, 128, 8
        $region16: #{tpu_custom_call.1} parent=11 // pred_fallthru
          _
        // Predicated region
        $region17: #{tpu_custom_call.1} parent=11 // pred_check
          %p182 = pneg %p86
        $region18: #{tpu_custom_call.1} parent=11 // pred_check_branch
          %184 = sbr.rel (%p182) target = $region20
        $region19: #{tpu_custom_call.1} parent=11 // pred_region
          _
        $region20: #{tpu_custom_call.1} parent=11 // pred_fallthru
          _
        // Predicated region
        $region21: #{tpu_custom_call.1} parent=11 // pred_check
          %p185 = pneg %p107
        $region22: #{tpu_custom_call.1} parent=11 // pred_check_branch
          %187 = sbr.rel (%p185) target = $region24
        $region23: #{tpu_custom_call.1} parent=11 // pred_region
          %s189 = ssub.s32 6144, 6144
          %190 = vsyncadd [#allocation8], %s189
          %s191 = sshll.u32 [#allocation9], 4
          %s192 = int_to_ptr.vmem [resolvable:$true] %s191
          %197 = dma.hbm_to_vmem [thread:$0]  %s3, 6144, %s192, [#allocation8], 128, 128, 8
        $region24: #{tpu_custom_call.1} parent=11 // pred_fallthru
          _
        // Predicated region
        $region25: #{tpu_custom_call.1} parent=11 // pred_check
          %p198 = pneg %p128
        $region26: #{tpu_custom_call.1} parent=11 // pred_check_branch
          %200 = sbr.rel (%p198) target = $region28
        $region27: #{tpu_custom_call.1} parent=11 // pred_region
          _
        $region28: #{tpu_custom_call.1} parent=11 // pred_fallthru
          _
      $region12: #{tpu_custom_call.1} parent=5 // pred_fallthru
        _
      %p201 = scmp.lt.s32.totalorder %s18, 2
      // Predicated region
      $region29: #{tpu_custom_call.1} parent=5 // pred_check
        %p202 = pneg %p201
      $region30: #{tpu_custom_call.1} parent=5 // pred_check_branch
        %204 = sbr.rel (%p202) target = $region32
      $region31: #{tpu_custom_call.1} parent=5 // pred_region
        // Predicated region
        $region33: #{tpu_custom_call.1} parent=31 // pred_check
          %p205 = pneg %p38
        $region34: #{tpu_custom_call.1} parent=31 // pred_check_branch
          %207 = sbr.rel (%p205) target = $region36
        $region35: #{tpu_custom_call.1} parent=31 // pred_region
          %s208 = sand.u32 %s28, 1
          %s209 = scalar_lea.sflag [#allocation5], %s208
          %s210 = sand.u32 %s28, 1
          %s211 = smul.addr %s210, 16
          %s212 = scalar_lea.vmem [#allocation4], %s211
          %s214 = ssub.s32 256, 256
          %215 = vsyncadd %s209, %s214
          %s216 = smul.addr %s18, 2
          %s217 = smul.addr %s216, 128
          %s218 = scalar_lea.hbm %s0, %s217
          %s219 = sshll.u32 %s212, 4
          %s220 = int_to_ptr.vmem [resolvable:$true] %s219
          %225 = dma.hbm_to_vmem [thread:$0]  %s218, 256, %s220, %s209, 128, 128, 8
        $region36: #{tpu_custom_call.1} parent=31 // pred_fallthru
          _
      $region32: #{tpu_custom_call.1} parent=5 // pred_fallthru
        _
      %p226 = scmp.le.s32.totalorder 1, %s18
      %p227 = scmp.lt.s32.totalorder %s18, 3
      %p228 = pnand %p226, %p227
      %p229 = pneg %p228
      // Predicated region
      $region37: #{tpu_custom_call.1} parent=5 // pred_check
        _
      $region38: #{tpu_custom_call.1} parent=5 // pred_check_branch
        %231 = sbr.rel (%p228) target = $region40
      $region39: #{tpu_custom_call.1} parent=5 // pred_region
        %s232 = ssub.s32 %s18, 1
        %s233 = sand.u32 %s31, 1
        %s234 = scalar_lea.sflag [#allocation5], %s233
        %s235 = sand.u32 %s31, 1
        %s236 = smul.addr %s235, 16
        %s237 = scalar_lea.vmem [#allocation4], %s236
        // Predicated region
        $region41: #{tpu_custom_call.1} parent=39 // pred_check
          %p238 = pneg %p44
        $region42: #{tpu_custom_call.1} parent=39 // pred_check_branch
          %240 = sbr.rel (%p238) target = $region44
        $region43: #{tpu_custom_call.1} parent=39 // pred_region
          %241 = dma.done %s234, 256
        $region44: #{tpu_custom_call.1} parent=39 // pred_fallthru
          _
        // Predicated region
        $region45: #{tpu_custom_call.1} parent=39 // pred_check
          %p242 = pneg %p65
        $region46: #{tpu_custom_call.1} parent=39 // pred_check_branch
          %244 = sbr.rel (%p242) target = $region48
        $region47: #{tpu_custom_call.1} parent=39 // pred_region
          %245 = dma.done [#allocation8], 6144
        $region48: #{tpu_custom_call.1} parent=39 // pred_fallthru
          _
        // Predicated region
        $region49: #{tpu_custom_call.1} parent=39 // pred_check
          %p246 = pneg %p107
        $region50: #{tpu_custom_call.1} parent=39 // pred_check_branch
          %248 = sbr.rel (%p246) target = $region52
        $region51: #{tpu_custom_call.1} parent=39 // pred_region
          %249 = dma.done [#allocation8], 6144
        $region52: #{tpu_custom_call.1} parent=39 // pred_fallthru
          _
        %s250 = sand.u32 %s31, 1
        %s251 = scalar_lea.sflag [#allocation5], %s250
        %s252 = sand.u32 %s31, 1
        %s253 = smul.addr %s252, 16
        %s254 = scalar_lea.vmem [#allocation4], %s253
        %p255 = pneg %p44
        %p256 = pneg %p41
        %p257 = pneg %p65
        %p258 = pneg %p62
        %p259 = pneg %p86
        %p260 = pneg %p83
        %p261 = pneg %p107
        %p262 = pneg %p104
        %p263 = pneg %p128
        %p264 = pneg %p125
        %p265 = pneg %p154
        %p266 = pneg %p151
        %s267 = sand.u32 %s141, 1
        %s268 = scalar_lea.sflag [#allocation6], %s267
        %s269 = sand.u32 %s141, 1
        %s270 = smul.addr %s269, 16
        %s271 = scalar_lea.vmem [#allocation10], %s270
        %272 = vst [vmem:[#allocation2] sm:$0x1] 0.0
        %273 = vst [vmem:[#allocation2 + $0x11] sm:$0x1] 0.0
        %274 = vst [vmem:[#allocation3] sm:$0x1] 0.0
        %275 = vst [vmem:[#allocation3 + $0x11] sm:$0x1] 0.0
        %v276 = vld [vmem:[%s237] sm:$0xff]
        %v277 = vld [vmem:[%s237 + $0x8] sm:$0xff]
        %278 = vst [vmem:[#allocation2 + $0x1] sm:$0xff] %v276
        %279 = vst [vmem:[#allocation2 + $0x9] sm:$0xff] %v277
        %v280 = vld [vmem:[#allocation2] sm:$0xff]
        %v281 = vld [vmem:[#allocation2 + $0x8] sm:$0xff]
        %v282 = vld [vmem:[#allocation7] sm:$0xff]
        %v283 = vld [vmem:[#allocation7 + $0x8] sm:$0xff]
        %v284 = vld [vmem:[#allocation7 + $0x10] sm:$0xff]
        %v285 = vld [vmem:[#allocation7 + $0x18] sm:$0xff]
        %v286 = vld [vmem:[#allocation7 + $0x20] sm:$0xff]
        %v287 = vld [vmem:[#allocation7 + $0x28] sm:$0xff]
        %v288 = vld [vmem:[#allocation7 + $0x30] sm:$0xff]
        %v289 = vld [vmem:[#allocation7 + $0x38] sm:$0xff]
        %v290 = vld [vmem:[#allocation7 + $0x40] sm:$0xff]
        %v291 = vld [vmem:[#allocation7 + $0x48] sm:$0xff]
        %v292 = vld [vmem:[#allocation7 + $0x50] sm:$0xff]
        %v293 = vld [vmem:[#allocation7 + $0x58] sm:$0xff]
        %v294 = vld [vmem:[#allocation7 + $0x60] sm:$0xff]
        %v295 = vld [vmem:[#allocation7 + $0x68] sm:$0xff]
        %v296 = vld [vmem:[#allocation7 + $0x70] sm:$0xff]
        %v297 = vld [vmem:[#allocation7 + $0x78] sm:$0xff]
        %v298 = vld [vmem:[#allocation2 + $0x1] sm:$0xff]
        %v299 = vld [vmem:[#allocation2 + $0x9] sm:$0xff]
        %s300 = scalar_lea.vmem [#allocation7], 128
        %v301 = vld [vmem:[%s300] sm:$0xff]
        %v302 = vld [vmem:[%s300 + $0x8] sm:$0xff]
        %v303 = vld [vmem:[%s300 + $0x10] sm:$0xff]
        %v304 = vld [vmem:[%s300 + $0x18] sm:$0xff]
        %v305 = vld [vmem:[%s300 + $0x20] sm:$0xff]
        %v306 = vld [vmem:[%s300 + $0x28] sm:$0xff]
        %v307 = vld [vmem:[%s300 + $0x30] sm:$0xff]
        %v308 = vld [vmem:[%s300 + $0x38] sm:$0xff]
        %v309 = vld [vmem:[%s300 + $0x40] sm:$0xff]
        %v310 = vld [vmem:[%s300 + $0x48] sm:$0xff]
        %v311 = vld [vmem:[%s300 + $0x50] sm:$0xff]
        %v312 = vld [vmem:[%s300 + $0x58] sm:$0xff]
        %v313 = vld [vmem:[%s300 + $0x60] sm:$0xff]
        %v314 = vld [vmem:[%s300 + $0x68] sm:$0xff]
        %v315 = vld [vmem:[%s300 + $0x70] sm:$0xff]
        %v316 = vld [vmem:[%s300 + $0x78] sm:$0xff]
        %317 = vmatprep.subr.mxu0 0.0
        %318 = vmatpush1.msra.mxu0 %v316
        %319 = vmatprep.subr.mxu0 0.0
        %320 = vmatpush1.msra.mxu0 %v315
        %321 = vmatprep.subr.mxu0 0.0
        %322 = vmatpush1.msra.mxu0 %v314
        %323 = vmatprep.subr.mxu0 0.0
        %324 = vmatpush1.msra.mxu0 %v313
        %325 = vmatprep.subr.mxu0 0.0
        %326 = vmatpush1.msra.mxu0 %v312
        %327 = vmatprep.subr.mxu0 0.0
        %328 = vmatpush1.msra.mxu0 %v311
        %329 = vmatprep.subr.mxu0 0.0
        %330 = vmatpush1.msra.mxu0 %v310
        %331 = vmatprep.subr.mxu0 0.0
        %332 = vmatpush1.msra.mxu0 %v309
        %333 = vmatprep.subr.mxu0 0.0
        %334 = vmatpush1.msra.mxu0 %v308
        %335 = vmatprep.subr.mxu0 0.0
        %336 = vmatpush1.msra.mxu0 %v307
        %337 = vmatprep.subr.mxu0 0.0
        %338 = vmatpush1.msra.mxu0 %v306
        %339 = vmatprep.subr.mxu0 0.0
        %340 = vmatpush1.msra.mxu0 %v305
        %341 = vmatprep.subr.mxu0 0.0
        %342 = vmatpush1.msra.mxu0 %v304
        %343 = vmatprep.subr.mxu0 0.0
        %344 = vmatpush1.msra.mxu0 %v303
        %345 = vmatprep.subr.mxu0 0.0
        %346 = vmatpush1.msra.mxu0 %v302
        %347 = vmatprep.subr.mxu0 0.0
        %348 = vmatpush1.msra.mxu0 %v301
        %349 = vmatprep.subr.mxu0 0.0
        %350 = vmatpush2.msra.mxu0 0.0
        %351 = vmatprep.subr.mxu0 0.0
        %352 = vmatpush2.msra.mxu0 0.0
        %353 = vmatprep.subr.mxu0 0.0
        %354 = vmatpush2.msra.mxu0 0.0
        %355 = vmatprep.subr.mxu0 0.0
        %356 = vmatpush2.msra.mxu0 0.0
        %357 = vmatprep.subr.mxu0 0.0
        %358 = vmatpush2.msra.mxu0 0.0
        %359 = vmatprep.subr.mxu0 0.0
        %360 = vmatpush2.msra.mxu0 0.0
        %361 = vmatprep.subr.mxu0 0.0
        %362 = vmatpush2.msra.mxu0 0.0
        %363 = vmatprep.subr.mxu0 0.0
        %364 = vmatpush2.msra.mxu0 0.0
        %365 = vmatprep.subr.mxu0 0.0
        %366 = vmatpush2.msra.mxu0 0.0
        %367 = vmatprep.subr.mxu0 0.0
        %368 = vmatpush2.msra.mxu0 0.0
        %369 = vmatprep.subr.mxu0 0.0
        %370 = vmatpush2.msra.mxu0 0.0
        %371 = vmatprep.subr.mxu0 0.0
        %372 = vmatpush2.msra.mxu0 0.0
        %373 = vmatprep.subr.mxu0 0.0
        %374 = vmatpush2.msra.mxu0 0.0
        %375 = vmatprep.subr.mxu0 0.0
        %376 = vmatpush2.msra.mxu0 0.0
        %377 = vmatprep.subr.mxu0 0.0
        %378 = vmatpush2.msra.mxu0 0.0
        %379 = vmatprep.subr.mxu0 0.0
        %380 = vmatpush2.msra.mxu0 0.0
        %381 = vmatprep.mubr.f32.mxu0 0.0
        %382 = vmatmul.mubr.f32.gmra.mxu0 %v298
        %v383 = vpop.f32.mrf.mxu0
        %v384 = vadd.f32 0.0, %v383
        %v385 = vpop.f32.mrf.mxu0
        %386 = vmatprep.mubr.f32.mxu0 0.0
        %387 = vmatmul.mubr.f32.gmra.mxu0 %v299
        %v388 = vpop.f32.mrf.mxu0
        %v389 = vadd.f32 0.0, %v388
        %v390 = vpop.f32.mrf.mxu0
        %391 = vdwg.mxu0
        %392 = vmatprep.subr.mxu0 0.0
        %393 = vmatpush1.msra.mxu0 %v297
        %394 = vmatprep.subr.mxu0 0.0
        %395 = vmatpush1.msra.mxu0 %v296
        %396 = vmatprep.subr.mxu0 0.0
        %397 = vmatpush1.msra.mxu0 %v295
        %398 = vmatprep.subr.mxu0 0.0
        %399 = vmatpush1.msra.mxu0 %v294
        %400 = vmatprep.subr.mxu0 0.0
        %401 = vmatpush1.msra.mxu0 %v293
        %402 = vmatprep.subr.mxu0 0.0
        %403 = vmatpush1.msra.mxu0 %v292
        %404 = vmatprep.subr.mxu0 0.0
        %405 = vmatpush1.msra.mxu0 %v291
        %406 = vmatprep.subr.mxu0 0.0
        %407 = vmatpush1.msra.mxu0 %v290
        %408 = vmatprep.subr.mxu0 0.0
        %409 = vmatpush1.msra.mxu0 %v289
        %410 = vmatprep.subr.mxu0 0.0
        %411 = vmatpush1.msra.mxu0 %v288
        %412 = vmatprep.subr.mxu0 0.0
        %413 = vmatpush1.msra.mxu0 %v287
        %414 = vmatprep.subr.mxu0 0.0
        %415 = vmatpush1.msra.mxu0 %v286
        %416 = vmatprep.subr.mxu0 0.0
        %417 = vmatpush1.msra.mxu0 %v285
        %418 = vmatprep.subr.mxu0 0.0
        %419 = vmatpush1.msra.mxu0 %v284
        %420 = vmatprep.subr.mxu0 0.0
        %421 = vmatpush1.msra.mxu0 %v283
        %422 = vmatprep.subr.mxu0 0.0
        %423 = vmatpush1.msra.mxu0 %v282
        %424 = vmatprep.subr.mxu0 0.0
        %425 = vmatpush2.msra.mxu0 0.0
        %426 = vmatprep.subr.mxu0 0.0
        %427 = vmatpush2.msra.mxu0 0.0
        %428 = vmatprep.subr.mxu0 0.0
        %429 = vmatpush2.msra.mxu0 0.0
        %430 = vmatprep.subr.mxu0 0.0
        %431 = vmatpush2.msra.mxu0 0.0
        %432 = vmatprep.subr.mxu0 0.0
        %433 = vmatpush2.msra.mxu0 0.0
        %434 = vmatprep.subr.mxu0 0.0
        %435 = vmatpush2.msra.mxu0 0.0
        %436 = vmatprep.subr.mxu0 0.0
        %437 = vmatpush2.msra.mxu0 0.0
        %438 = vmatprep.subr.mxu0 0.0
        %439 = vmatpush2.msra.mxu0 0.0
        %440 = vmatprep.subr.mxu0 0.0
        %441 = vmatpush2.msra.mxu0 0.0
        %442 = vmatprep.subr.mxu0 0.0
        %443 = vmatpush2.msra.mxu0 0.0
        %444 = vmatprep.subr.mxu0 0.0
        %445 = vmatpush2.msra.mxu0 0.0
        %446 = vmatprep.subr.mxu0 0.0
        %447 = vmatpush2.msra.mxu0 0.0
        %448 = vmatprep.subr.mxu0 0.0
        %449 = vmatpush2.msra.mxu0 0.0
        %450 = vmatprep.subr.mxu0 0.0
        %451 = vmatpush2.msra.mxu0 0.0
        %452 = vmatprep.subr.mxu0 0.0
        %453 = vmatpush2.msra.mxu0 0.0
        %454 = vmatprep.subr.mxu0 0.0
        %455 = vmatpush2.msra.mxu0 0.0
        %456 = vmatprep.mubr.f32.mxu0 0.0
        %457 = vmatmul.mubr.f32.gmra.mxu0 %v280
        %v458 = vpop.f32.mrf.mxu0
        %v459 = vadd.f32 %v384, %v458
        %v460 = vpop.f32.mrf.mxu0
        %461 = vmatprep.mubr.f32.mxu0 0.0
        %462 = vmatmul.mubr.f32.gmra.mxu0 %v281
        %v463 = vpop.f32.mrf.mxu0
        %v464 = vadd.f32 %v389, %v463
        %v465 = vpop.f32.mrf.mxu0
        %466 = vdwg.mxu0
        %v467 = vld [vmem:[#allocation2 + $0x2] sm:$0xff]
        %v468 = vld [vmem:[#allocation2 + $0xa] sm:$0xff]
        %s469 = scalar_lea.vmem [#allocation7], 256
        %v470 = vld [vmem:[%s469] sm:$0xff]
        %v471 = vld [vmem:[%s469 + $0x8] sm:$0xff]
        %v472 = vld [vmem:[%s469 + $0x10] sm:$0xff]
        %v473 = vld [vmem:[%s469 + $0x18] sm:$0xff]
        %v474 = vld [vmem:[%s469 + $0x20] sm:$0xff]
        %v475 = vld [vmem:[%s469 + $0x28] sm:$0xff]
        %v476 = vld [vmem:[%s469 + $0x30] sm:$0xff]
        %v477 = vld [vmem:[%s469 + $0x38] sm:$0xff]
        %v478 = vld [vmem:[%s469 + $0x40] sm:$0xff]
        %v479 = vld [vmem:[%s469 + $0x48] sm:$0xff]
        %v480 = vld [vmem:[%s469 + $0x50] sm:$0xff]
        %v481 = vld [vmem:[%s469 + $0x58] sm:$0xff]
        %v482 = vld [vmem:[%s469 + $0x60] sm:$0xff]
        %v483 = vld [vmem:[%s469 + $0x68] sm:$0xff]
        %v484 = vld [vmem:[%s469 + $0x70] sm:$0xff]
        %v485 = vld [vmem:[%s469 + $0x78] sm:$0xff]
        %486 = vmatprep.subr.mxu0 0.0
        %487 = vmatpush1.msra.mxu0 %v485
        %488 = vmatprep.subr.mxu0 0.0
        %489 = vmatpush1.msra.mxu0 %v484
        %490 = vmatprep.subr.mxu0 0.0
        %491 = vmatpush1.msra.mxu0 %v483
        %492 = vmatprep.subr.mxu0 0.0
        %493 = vmatpush1.msra.mxu0 %v482
        %494 = vmatprep.subr.mxu0 0.0
        %495 = vmatpush1.msra.mxu0 %v481
        %496 = vmatprep.subr.mxu0 0.0
        %497 = vmatpush1.msra.mxu0 %v480
        %498 = vmatprep.subr.mxu0 0.0
        %499 = vmatpush1.msra.mxu0 %v479
        %500 = vmatprep.subr.mxu0 0.0
        %501 = vmatpush1.msra.mxu0 %v478
        %502 = vmatprep.subr.mxu0 0.0
        %503 = vmatpush1.msra.mxu0 %v477
        %504 = vmatprep.subr.mxu0 0.0
        %505 = vmatpush1.msra.mxu0 %v476
        %506 = vmatprep.subr.mxu0 0.0
        %507 = vmatpush1.msra.mxu0 %v475
        %508 = vmatprep.subr.mxu0 0.0
        %509 = vmatpush1.msra.mxu0 %v474
        %510 = vmatprep.subr.mxu0 0.0
        %511 = vmatpush1.msra.mxu0 %v473
        %512 = vmatprep.subr.mxu0 0.0
        %513 = vmatpush1.msra.mxu0 %v472
        %514 = vmatprep.subr.mxu0 0.0
        %515 = vmatpush1.msra.mxu0 %v471
        %516 = vmatprep.subr.mxu0 0.0
        %517 = vmatpush1.msra.mxu0 %v470
        %518 = vmatprep.subr.mxu0 0.0
        %519 = vmatpush2.msra.mxu0 0.0
        %520 = vmatprep.subr.mxu0 0.0
        %521 = vmatpush2.msra.mxu0 0.0
        %522 = vmatprep.subr.mxu0 0.0
        %523 = vmatpush2.msra.mxu0 0.0
        %524 = vmatprep.subr.mxu0 0.0
        %525 = vmatpush2.msra.mxu0 0.0
        %526 = vmatprep.subr.mxu0 0.0
        %527 = vmatpush2.msra.mxu0 0.0
        %528 = vmatprep.subr.mxu0 0.0
        %529 = vmatpush2.msra.mxu0 0.0
        %530 = vmatprep.subr.mxu0 0.0
        %531 = vmatpush2.msra.mxu0 0.0
        %532 = vmatprep.subr.mxu0 0.0
        %533 = vmatpush2.msra.mxu0 0.0
        %534 = vmatprep.subr.mxu0 0.0
        %535 = vmatpush2.msra.mxu0 0.0
        %536 = vmatprep.subr.mxu0 0.0
        %537 = vmatpush2.msra.mxu0 0.0
        %538 = vmatprep.subr.mxu0 0.0
        %539 = vmatpush2.msra.mxu0 0.0
        %540 = vmatprep.subr.mxu0 0.0
        %541 = vmatpush2.msra.mxu0 0.0
        %542 = vmatprep.subr.mxu0 0.0
        %543 = vmatpush2.msra.mxu0 0.0
        %544 = vmatprep.subr.mxu0 0.0
        %545 = vmatpush2.msra.mxu0 0.0
        %546 = vmatprep.subr.mxu0 0.0
        %547 = vmatpush2.msra.mxu0 0.0
        %548 = vmatprep.subr.mxu0 0.0
        %549 = vmatpush2.msra.mxu0 0.0
        %550 = vmatprep.mubr.f32.mxu0 0.0
        %551 = vmatmul.mubr.f32.gmra.mxu0 %v467
        %v552 = vpop.f32.mrf.mxu0
        %v553 = vadd.f32 0.0, %v552
        %v554 = vpop.f32.mrf.mxu0
        %555 = vmatprep.mubr.f32.mxu0 0.0
        %556 = vmatmul.mubr.f32.gmra.mxu0 %v468
        %v557 = vpop.f32.mrf.mxu0
        %v558 = vadd.f32 0.0, %v557
        %v559 = vpop.f32.mrf.mxu0
        %560 = vdwg.mxu0
        %v561 = vadd.f32 %v459, %v553
        %v562 = vadd.f32 %v464, %v558
        %v563 = vld [vmem:[%s2] sm:$0x1]
        %v565 = vlaneseq
        %v566 = vshrl.u32 %v565, 7
        %v567 = vsub.s32 0, %v566
        %v568 = vrot.slane %v563, %v567
        %v570 = vadd.f32 %v561, %v568
        %v571 = vadd.f32 %v562, %v568
        %572 = vst [vmem:[#allocation3 + $0x1] sm:$0xff] %v570
        %573 = vst [vmem:[#allocation3 + $0x9] sm:$0xff] %v571
        %v574 = vld [vmem:[#allocation3] sm:$0xff]
        %v575 = vld [vmem:[#allocation3 + $0x8] sm:$0xff]
        %v576 = vld [vmem:[#allocation9] sm:$0xff]
        %v577 = vld [vmem:[#allocation9 + $0x8] sm:$0xff]
        %v578 = vld [vmem:[#allocation9 + $0x10] sm:$0xff]
        %v579 = vld [vmem:[#allocation9 + $0x18] sm:$0xff]
        %v580 = vld [vmem:[#allocation9 + $0x20] sm:$0xff]
        %v581 = vld [vmem:[#allocation9 + $0x28] sm:$0xff]
        %v582 = vld [vmem:[#allocation9 + $0x30] sm:$0xff]
        %v583 = vld [vmem:[#allocation9 + $0x38] sm:$0xff]
        %v584 = vld [vmem:[#allocation9 + $0x40] sm:$0xff]
        %v585 = vld [vmem:[#allocation9 + $0x48] sm:$0xff]
        %v586 = vld [vmem:[#allocation9 + $0x50] sm:$0xff]
        %v587 = vld [vmem:[#allocation9 + $0x58] sm:$0xff]
        %v588 = vld [vmem:[#allocation9 + $0x60] sm:$0xff]
        %v589 = vld [vmem:[#allocation9 + $0x68] sm:$0xff]
        %v590 = vld [vmem:[#allocation9 + $0x70] sm:$0xff]
        %v591 = vld [vmem:[#allocation9 + $0x78] sm:$0xff]
        %v592 = vld [vmem:[#allocation3 + $0x1] sm:$0xff]
        %v593 = vld [vmem:[#allocation3 + $0x9] sm:$0xff]
        %s594 = scalar_lea.vmem [#allocation9], 128
        %v595 = vld [vmem:[%s594] sm:$0xff]
        %v596 = vld [vmem:[%s594 + $0x8] sm:$0xff]
        %v597 = vld [vmem:[%s594 + $0x10] sm:$0xff]
        %v598 = vld [vmem:[%s594 + $0x18] sm:$0xff]
        %v599 = vld [vmem:[%s594 + $0x20] sm:$0xff]
        %v600 = vld [vmem:[%s594 + $0x28] sm:$0xff]
        %v601 = vld [vmem:[%s594 + $0x30] sm:$0xff]
        %v602 = vld [vmem:[%s594 + $0x38] sm:$0xff]
        %v603 = vld [vmem:[%s594 + $0x40] sm:$0xff]
        %v604 = vld [vmem:[%s594 + $0x48] sm:$0xff]
        %v605 = vld [vmem:[%s594 + $0x50] sm:$0xff]
        %v606 = vld [vmem:[%s594 + $0x58] sm:$0xff]
        %v607 = vld [vmem:[%s594 + $0x60] sm:$0xff]
        %v608 = vld [vmem:[%s594 + $0x68] sm:$0xff]
        %v609 = vld [vmem:[%s594 + $0x70] sm:$0xff]
        %v610 = vld [vmem:[%s594 + $0x78] sm:$0xff]
        %611 = vmatprep.subr.mxu0 0.0
        %612 = vmatpush1.msra.mxu0 %v610
        %613 = vmatprep.subr.mxu0 0.0
        %614 = vmatpush1.msra.mxu0 %v609
        %615 = vmatprep.subr.mxu0 0.0
        %616 = vmatpush1.msra.mxu0 %v608
        %617 = vmatprep.subr.mxu0 0.0
        %618 = vmatpush1.msra.mxu0 %v607
        %619 = vmatprep.subr.mxu0 0.0
        %620 = vmatpush1.msra.mxu0 %v606
        %621 = vmatprep.subr.mxu0 0.0
        %622 = vmatpush1.msra.mxu0 %v605
        %623 = vmatprep.subr.mxu0 0.0
        %624 = vmatpush1.msra.mxu0 %v604
        %625 = vmatprep.subr.mxu0 0.0
        %626 = vmatpush1.msra.mxu0 %v603
        %627 = vmatprep.subr.mxu0 0.0
        %628 = vmatpush1.msra.mxu0 %v602
        %629 = vmatprep.subr.mxu0 0.0
        %630 = vmatpush1.msra.mxu0 %v601
        %631 = vmatprep.subr.mxu0 0.0
        %632 = vmatpush1.msra.mxu0 %v600
        %633 = vmatprep.subr.mxu0 0.0
        %634 = vmatpush1.msra.mxu0 %v599
        %635 = vmatprep.subr.mxu0 0.0
        %636 = vmatpush1.msra.mxu0 %v598
        %637 = vmatprep.subr.mxu0 0.0
        %638 = vmatpush1.msra.mxu0 %v597
        %639 = vmatprep.subr.mxu0 0.0
        %640 = vmatpush1.msra.mxu0 %v596
        %641 = vmatprep.subr.mxu0 0.0
        %642 = vmatpush1.msra.mxu0 %v595
        %643 = vmatprep.subr.mxu0 0.0
        %644 = vmatpush2.msra.mxu0 0.0
        %645 = vmatprep.subr.mxu0 0.0
        %646 = vmatpush2.msra.mxu0 0.0
        %647 = vmatprep.subr.mxu0 0.0
        %648 = vmatpush2.msra.mxu0 0.0
        %649 = vmatprep.subr.mxu0 0.0
        %650 = vmatpush2.msra.mxu0 0.0
        %651 = vmatprep.subr.mxu0 0.0
        %652 = vmatpush2.msra.mxu0 0.0
        %653 = vmatprep.subr.mxu0 0.0
        %654 = vmatpush2.msra.mxu0 0.0
        %655 = vmatprep.subr.mxu0 0.0
        %656 = vmatpush2.msra.mxu0 0.0
        %657 = vmatprep.subr.mxu0 0.0
        %658 = vmatpush2.msra.mxu0 0.0
        %659 = vmatprep.subr.mxu0 0.0
        %660 = vmatpush2.msra.mxu0 0.0
        %661 = vmatprep.subr.mxu0 0.0
        %662 = vmatpush2.msra.mxu0 0.0
        %663 = vmatprep.subr.mxu0 0.0
        %664 = vmatpush2.msra.mxu0 0.0
        %665 = vmatprep.subr.mxu0 0.0
        %666 = vmatpush2.msra.mxu0 0.0
        %667 = vmatprep.subr.mxu0 0.0
        %668 = vmatpush2.msra.mxu0 0.0
        %669 = vmatprep.subr.mxu0 0.0
        %670 = vmatpush2.msra.mxu0 0.0
        %671 = vmatprep.subr.mxu0 0.0
        %672 = vmatpush2.msra.mxu0 0.0
        %673 = vmatprep.subr.mxu0 0.0
        %674 = vmatpush2.msra.mxu0 0.0
        %675 = vmatprep.mubr.f32.mxu0 0.0
        %676 = vmatmul.mubr.f32.gmra.mxu0 %v592
        %v677 = vpop.f32.mrf.mxu0
        %v678 = vadd.f32 0.0, %v677
        %v679 = vpop.f32.mrf.mxu0
        %680 = vmatprep.mubr.f32.mxu0 0.0
        %681 = vmatmul.mubr.f32.gmra.mxu0 %v593
        %v682 = vpop.f32.mrf.mxu0
        %v683 = vadd.f32 0.0, %v682
        %v684 = vpop.f32.mrf.mxu0
        %685 = vdwg.mxu0
        %686 = vmatprep.subr.mxu0 0.0
        %687 = vmatpush1.msra.mxu0 %v591
        %688 = vmatprep.subr.mxu0 0.0
        %689 = vmatpush1.msra.mxu0 %v590
        %690 = vmatprep.subr.mxu0 0.0
        %691 = vmatpush1.msra.mxu0 %v589
        %692 = vmatprep.subr.mxu0 0.0
        %693 = vmatpush1.msra.mxu0 %v588
        %694 = vmatprep.subr.mxu0 0.0
        %695 = vmatpush1.msra.mxu0 %v587
        %696 = vmatprep.subr.mxu0 0.0
        %697 = vmatpush1.msra.mxu0 %v586
        %698 = vmatprep.subr.mxu0 0.0
        %699 = vmatpush1.msra.mxu0 %v585
        %700 = vmatprep.subr.mxu0 0.0
        %701 = vmatpush1.msra.mxu0 %v584
        %702 = vmatprep.subr.mxu0 0.0
        %703 = vmatpush1.msra.mxu0 %v583
        %704 = vmatprep.subr.mxu0 0.0
        %705 = vmatpush1.msra.mxu0 %v582
        %706 = vmatprep.subr.mxu0 0.0
        %707 = vmatpush1.msra.mxu0 %v581
        %708 = vmatprep.subr.mxu0 0.0
        %709 = vmatpush1.msra.mxu0 %v580
        %710 = vmatprep.subr.mxu0 0.0
        %711 = vmatpush1.msra.mxu0 %v579
        %712 = vmatprep.subr.mxu0 0.0
        %713 = vmatpush1.msra.mxu0 %v578
        %714 = vmatprep.subr.mxu0 0.0
        %715 = vmatpush1.msra.mxu0 %v577
        %716 = vmatprep.subr.mxu0 0.0
        %717 = vmatpush1.msra.mxu0 %v576
        %718 = vmatprep.subr.mxu0 0.0
        %719 = vmatpush2.msra.mxu0 0.0
        %720 = vmatprep.subr.mxu0 0.0
        %721 = vmatpush2.msra.mxu0 0.0
        %722 = vmatprep.subr.mxu0 0.0
        %723 = vmatpush2.msra.mxu0 0.0
        %724 = vmatprep.subr.mxu0 0.0
        %725 = vmatpush2.msra.mxu0 0.0
        %726 = vmatprep.subr.mxu0 0.0
        %727 = vmatpush2.msra.mxu0 0.0
        %728 = vmatprep.subr.mxu0 0.0
        %729 = vmatpush2.msra.mxu0 0.0
        %730 = vmatprep.subr.mxu0 0.0
        %731 = vmatpush2.msra.mxu0 0.0
        %732 = vmatprep.subr.mxu0 0.0
        %733 = vmatpush2.msra.mxu0 0.0
        %734 = vmatprep.subr.mxu0 0.0
        %735 = vmatpush2.msra.mxu0 0.0
        %736 = vmatprep.subr.mxu0 0.0
        %737 = vmatpush2.msra.mxu0 0.0
        %738 = vmatprep.subr.mxu0 0.0
        %739 = vmatpush2.msra.mxu0 0.0
        %740 = vmatprep.subr.mxu0 0.0
        %741 = vmatpush2.msra.mxu0 0.0
        %742 = vmatprep.subr.mxu0 0.0
        %743 = vmatpush2.msra.mxu0 0.0
        %744 = vmatprep.subr.mxu0 0.0
        %745 = vmatpush2.msra.mxu0 0.0
        %746 = vmatprep.subr.mxu0 0.0
        %747 = vmatpush2.msra.mxu0 0.0
        %748 = vmatprep.subr.mxu0 0.0
        %749 = vmatpush2.msra.mxu0 0.0
        %750 = vmatprep.mubr.f32.mxu0 0.0
        %751 = vmatmul.mubr.f32.gmra.mxu0 %v574
        %v752 = vpop.f32.mrf.mxu0
        %v753 = vadd.f32 %v678, %v752
        %v754 = vpop.f32.mrf.mxu0
        %755 = vmatprep.mubr.f32.mxu0 0.0
        %756 = vmatmul.mubr.f32.gmra.mxu0 %v575
        %v757 = vpop.f32.mrf.mxu0
        %v758 = vadd.f32 %v683, %v757
        %v759 = vpop.f32.mrf.mxu0
        %760 = vdwg.mxu0
        %v761 = vld [vmem:[#allocation3 + $0x2] sm:$0xff]
        %v762 = vld [vmem:[#allocation3 + $0xa] sm:$0xff]
        %s763 = scalar_lea.vmem [#allocation9], 256
        %v764 = vld [vmem:[%s763] sm:$0xff]
        %v765 = vld [vmem:[%s763 + $0x8] sm:$0xff]
        %v766 = vld [vmem:[%s763 + $0x10] sm:$0xff]
        %v767 = vld [vmem:[%s763 + $0x18] sm:$0xff]
        %v768 = vld [vmem:[%s763 + $0x20] sm:$0xff]
        %v769 = vld [vmem:[%s763 + $0x28] sm:$0xff]
        %v770 = vld [vmem:[%s763 + $0x30] sm:$0xff]
        %v771 = vld [vmem:[%s763 + $0x38] sm:$0xff]
        %v772 = vld [vmem:[%s763 + $0x40] sm:$0xff]
        %v773 = vld [vmem:[%s763 + $0x48] sm:$0xff]
        %v774 = vld [vmem:[%s763 + $0x50] sm:$0xff]
        %v775 = vld [vmem:[%s763 + $0x58] sm:$0xff]
        %v776 = vld [vmem:[%s763 + $0x60] sm:$0xff]
        %v777 = vld [vmem:[%s763 + $0x68] sm:$0xff]
        %v778 = vld [vmem:[%s763 + $0x70] sm:$0xff]
        %v779 = vld [vmem:[%s763 + $0x78] sm:$0xff]
        %780 = vmatprep.subr.mxu0 0.0
        %781 = vmatpush1.msra.mxu0 %v779
        %782 = vmatprep.subr.mxu0 0.0
        %783 = vmatpush1.msra.mxu0 %v778
        %784 = vmatprep.subr.mxu0 0.0
        %785 = vmatpush1.msra.mxu0 %v777
        %786 = vmatprep.subr.mxu0 0.0
        %787 = vmatpush1.msra.mxu0 %v776
        %788 = vmatprep.subr.mxu0 0.0
        %789 = vmatpush1.msra.mxu0 %v775
        %790 = vmatprep.subr.mxu0 0.0
        %791 = vmatpush1.msra.mxu0 %v774
        %792 = vmatprep.subr.mxu0 0.0
        %793 = vmatpush1.msra.mxu0 %v773
        %794 = vmatprep.subr.mxu0 0.0
        %795 = vmatpush1.msra.mxu0 %v772
        %796 = vmatprep.subr.mxu0 0.0
        %797 = vmatpush1.msra.mxu0 %v771
        %798 = vmatprep.subr.mxu0 0.0
        %799 = vmatpush1.msra.mxu0 %v770
        %800 = vmatprep.subr.mxu0 0.0
        %801 = vmatpush1.msra.mxu0 %v769
        %802 = vmatprep.subr.mxu0 0.0
        %803 = vmatpush1.msra.mxu0 %v768
        %804 = vmatprep.subr.mxu0 0.0
        %805 = vmatpush1.msra.mxu0 %v767
        %806 = vmatprep.subr.mxu0 0.0
        %807 = vmatpush1.msra.mxu0 %v766
        %808 = vmatprep.subr.mxu0 0.0
        %809 = vmatpush1.msra.mxu0 %v765
        %810 = vmatprep.subr.mxu0 0.0
        %811 = vmatpush1.msra.mxu0 %v764
        %812 = vmatprep.subr.mxu0 0.0
        %813 = vmatpush2.msra.mxu0 0.0
        %814 = vmatprep.subr.mxu0 0.0
        %815 = vmatpush2.msra.mxu0 0.0
        %816 = vmatprep.subr.mxu0 0.0
        %817 = vmatpush2.msra.mxu0 0.0
        %818 = vmatprep.subr.mxu0 0.0
        %819 = vmatpush2.msra.mxu0 0.0
        %820 = vmatprep.subr.mxu0 0.0
        %821 = vmatpush2.msra.mxu0 0.0
        %822 = vmatprep.subr.mxu0 0.0
        %823 = vmatpush2.msra.mxu0 0.0
        %824 = vmatprep.subr.mxu0 0.0
        %825 = vmatpush2.msra.mxu0 0.0
        %826 = vmatprep.subr.mxu0 0.0
        %827 = vmatpush2.msra.mxu0 0.0
        %828 = vmatprep.subr.mxu0 0.0
        %829 = vmatpush2.msra.mxu0 0.0
        %830 = vmatprep.subr.mxu0 0.0
        %831 = vmatpush2.msra.mxu0 0.0
        %832 = vmatprep.subr.mxu0 0.0
        %833 = vmatpush2.msra.mxu0 0.0
        %834 = vmatprep.subr.mxu0 0.0
        %835 = vmatpush2.msra.mxu0 0.0
        %836 = vmatprep.subr.mxu0 0.0
        %837 = vmatpush2.msra.mxu0 0.0
        %838 = vmatprep.subr.mxu0 0.0
        %839 = vmatpush2.msra.mxu0 0.0
        %840 = vmatprep.subr.mxu0 0.0
        %841 = vmatpush2.msra.mxu0 0.0
        %842 = vmatprep.subr.mxu0 0.0
        %843 = vmatpush2.msra.mxu0 0.0
        %844 = vmatprep.mubr.f32.mxu0 0.0
        %845 = vmatmul.mubr.f32.gmra.mxu0 %v761
        %v846 = vpop.f32.mrf.mxu0
        %v847 = vadd.f32 0.0, %v846
        %v848 = vpop.f32.mrf.mxu0
        %849 = vmatprep.mubr.f32.mxu0 0.0
        %850 = vmatmul.mubr.f32.gmra.mxu0 %v762
        %v851 = vpop.f32.mrf.mxu0
        %v852 = vadd.f32 0.0, %v851
        %v853 = vpop.f32.mrf.mxu0
        %854 = vdwg.mxu0
        %v855 = vadd.f32 %v753, %v847
        %v856 = vadd.f32 %v758, %v852
        %v857 = vld [vmem:[%s4] sm:$0x1]
        %v859 = vlaneseq
        %v860 = vshrl.u32 %v859, 7
        %v861 = vsub.s32 0, %v860
        %v862 = vrot.slane %v857, %v861
        %v864 = vadd.f32 %v855, %v862
        %v865 = vadd.f32 %v856, %v862
        %v866 = vadd.f32 %v864, %v276
        %v867 = vadd.f32 %v865, %v277
        %v868 = vmul.f32 %v866, 0.5
        %v869 = vmul.f32 %v867, 0.5
        %v870 = vmul.f32 %v866, 0.70710677
        %v871 = vmul.f32 %v867, 0.70710677
        %v872 = verf.f32.pop %v870
        %v873 = verf.f32.pop %v871
        %v874 = vadd.f32 %v872, 1.0
        %v875 = vadd.f32 %v873, 1.0
        %v876 = vmul.f32 %v868, %v874
        %v877 = vmul.f32 %v869, %v875
        %878 = vst [vmem:[%s271] sm:$0xff] %v876
        %879 = vst [vmem:[%s271 + $0x8] sm:$0xff] %v877
        %s880 = sand.u32 %s141, 1
        %s881 = scalar_lea.sflag [#allocation6], %s880
        %s882 = sand.u32 %s141, 1
        %s883 = smul.addr %s882, 16
        %s884 = scalar_lea.vmem [#allocation10], %s883
        // Predicated region
        $region53: #{tpu_custom_call.1} parent=39 // pred_check
          %p885 = pneg %p151
        $region54: #{tpu_custom_call.1} parent=39 // pred_check_branch
          %887 = sbr.rel (%p885) target = $region56
        $region55: #{tpu_custom_call.1} parent=39 // pred_region
          %s889 = ssub.s32 256, 256
          %890 = vsyncadd %s881, %s889
          %s891 = smul.addr %s23, 2
          %s892 = smul.addr %s891, 128
          %s893 = scalar_lea.hbm %s5, %s892
          %s894 = sshll.u32 %s884, 4
          %s895 = int_to_ptr.vmem [resolvable:$true] %s894
          %900 = dma.vmem_to_hbm [thread:$0]  %s895, 256, %s893, %s881, 128, 128, 8
        $region56: #{tpu_custom_call.1} parent=39 // pred_fallthru
          _
      $region40: #{tpu_custom_call.1} parent=5 // pred_fallthru
        _
      %p901 = scmp.le.s32.totalorder 2, %s18
      // Predicated region
      $region57: #{tpu_custom_call.1} parent=5 // pred_check
        %p902 = pneg %p901
      $region58: #{tpu_custom_call.1} parent=5 // pred_check_branch
        %904 = sbr.rel (%p902) target = $region60
      $region59: #{tpu_custom_call.1} parent=5 // pred_region
        %s905 = ssub.s32 %s18, 2
        // Predicated region
        $region61: #{tpu_custom_call.1} parent=59 // pred_check
          %p906 = pneg %p157
        $region62: #{tpu_custom_call.1} parent=59 // pred_check_branch
          %908 = sbr.rel (%p906) target = $region64
        $region63: #{tpu_custom_call.1} parent=59 // pred_region
          %s909 = sand.u32 %s142, 1
          %s910 = scalar_lea.sflag [#allocation6], %s909
          %s911 = sand.u32 %s142, 1
          %s912 = smul.addr %s911, 16
          %s913 = scalar_lea.vmem [#allocation10], %s912
          %914 = dma.done %s910, 256
        $region64: #{tpu_custom_call.1} parent=59 // pred_fallthru
          _
      $region60: #{tpu_custom_call.1} parent=5 // pred_fallthru
        _
    $region6: #{tpu_custom_call.1} parent=1 // loop_footer
      %s22 = sadd.s32 1, %s18
    $region7: #{tpu_custom_call.1} parent=1 // loop_footer_branch
      %17 = sbr.rel target = $region3
    $region8: #{tpu_custom_call.1} parent=1 // loop_exit
      _
    %915 = vsyncpa [#allocation5], 1
    %s916 = scalar_lea.sflag [#allocation5], 1
    %917 = vsyncpa %s916, 1
    %918 = vsyncpa [#allocation8], 1
    %919 = vsyncpa [#allocation6], 1
    %s920 = scalar_lea.sflag [#allocation6], 1
    %921 = vsyncpa %s920, 1

</llo_original>
